<compile_context>
chip_gen: v7x
topology: tpu7x:2x2x1
jax: 0.10.0
libtpu: 0.0.40
codegen_flags: <defaults>
</compile_context>

<pallas_src>
import functools

import numpy as np
import jax
import jax.numpy as jnp
from jax import lax
from jax.experimental import pallas as pl
from jax.experimental.pallas import tpu as pltpu

# ---- module hyper-parameters (BiReconstructionLoss.__init__ defaults) ----
SIGMA = 0.1
GAMMA = 0.001
LAMBDA_REC_BACK = 1.0
GAUSS_CONST = 0.5 * float(np.log(2.0 * np.pi)) + float(np.log(SIGMA))

LANE = 128
SUB = 8
CHUNK_ROWS = 512        # rows per in-kernel accumulation chunk (256 KiB f32)
SPLIT_MIN_ROWS = 256    # split across TensorCores when there is >= 128 KiB of work


def _cdiv(a, b):
    return -(-a // b)


def _round_up(x, m):
    return _cdiv(x, m) * m


def _round_down(x, m):
    return (x // m) * m


@functools.lru_cache(maxsize=1)
def _device_defaults():
    """(max_tile_rows, vmem_limit_bytes) per TPU generation (perf-review tuning)."""
    try:
        kind = jax.devices()[0].device_kind.lower()
    except Exception:  # pragma: no cover - be robust if backend query fails
        return 2048, None
    if "v6" in kind or "v7" in kind:
        # 4 MiB blocks; fused usage = 3 streams x 2 buffers x 4 MiB = 24 MiB.
        return 8192, 48 * 1024 * 1024
    # v5e (16 MiB scoped default) and older/unknown chips: stay at 1 MiB blocks.
    return 2048, 32 * 1024 * 1024


# --------------------------- layout helpers ---------------------------
def _as_rows(x):
    """View x as a (rows, 128) stream.

    Zero-copy bitcast reshape when numel % 128 == 0 (the common case); otherwise the
    flat tail is zero-padded (zeros contribute 0 to |x-t| and z^2).
    """
    total = int(x.size)
    rows = _cdiv(total, LANE)
    if total % LANE == 0:
        return x.reshape(rows, LANE), rows
    # TODO(synk): a fully copy-free path for numel % 128 != 0 would need element-level
    # masking on a raw 1-D HBM ref; not worth the complexity for this rare case.
    flat = jnp.pad(x.reshape(-1), (0, rows * LANE - total))
    return flat.reshape(rows, LANE), rows


def _row_quantum(*arrays):
    """Sublane quantum so blocks stay packing-friendly for narrow dtypes."""
    return max(SUB, *(32 // np.dtype(a.dtype).itemsize for a in arrays))


def _plan(rows, max_tile_rows, quantum):
    """Choose (tile_rows, num_splits, blocks_per_split, need_mask, last_block)."""
    num_splits = 2 if rows >= SPLIT_MIN_ROWS else 1
    tile_cap = min(max_tile_rows, _round_down(rows, quantum))   # never exceeds the array
    blocks = num_splits * max(1, _cdiv(rows, num_splits * tile_cap))
    tile_rows = min(tile_cap, _round_up(_cdiv(rows, blocks), quantum))
    blocks_per_split = blocks // num_splits
    need_mask = (blocks * tile_rows != rows)        # ragged last tile or phantom step
    last_block = max(0, _cdiv(rows, tile_rows) - 1)  # clamp target for phantom steps
    return tile_rows, num_splits, blocks_per_split, need_mask, last_block


# --------------------------- per-chunk contributions ---------------------------
def _l1_contrib(x, t):
    return (jnp.abs(x - t),)


def _fused_contrib(x, t, z):
    return (jnp.abs(x - t), z * z)


# ------------------------------- kernel factory ---------------------------------
def _make_kernel(contrib, n_in, n_out, *, tile_rows, rows, bps, need_mask):
    chunk = min(CHUNK_ROWS, tile_rows)
    n_full, rem = divmod(tile_rows, chunk)

    def kernel(*refs):
        in_refs = refs[:n_in]
        out_refs = refs[n_in:n_in + n_out]
        step = pl.program_id(1)

        @pl.when(step == 0)
        def _():
            for o in out_refs:
                o[...] = jnp.zeros_like(o)

        # First global row of this (logical, unclamped) tile -> used for masking.
        row0 = (pl.program_id(0) * bps + step) * tile_rows

        def partial_sums(off, size):
            xs = [r[pl.ds(off, size), :].astype(jnp.float32) for r in in_refs]
            vals = contrib(*xs)
            if need_mask:
                ridx = lax.broadcasted_iota(jnp.int32, (size, LANE), 0)
                ok = (row0 + off) + ridx < rows
                vals = tuple(jnp.where(ok, v, 0.0) for v in vals)
            return tuple(v.reshape(size // SUB, SUB, LANE).sum(axis=0) for v in vals)

        init = tuple(jnp.zeros((SUB, LANE), jnp.float32) for _ in range(n_out))

        def body(c, acc):
            off = pl.multiple_of(c * chunk, chunk)
            return tuple(a + s for a, s in zip(acc, partial_sums(off, chunk)))

        acc = lax.fori_loop(0, n_full, body, init, unroll=True) if n_full else init
        if rem:
            acc = tuple(a + s for a, s in zip(acc, partial_sums(n_full * chunk, rem)))
        for o, a in zip(out_refs, acc):
            o[...] += a

    return kernel


# ------------------------------ pallas_call wrapper -----------------------------
def _streaming_reduce(contrib, inputs_2d, n_out, rows, quantum, max_tile_rows, vmem_limit):
    """Streaming sums over (rows, 128) inputs.

    Returns a tuple of `n_out` arrays of shape (num_splits*8, 128); the caller does the
    tiny final reduction in plain JAX.
    """
    tile_rows, num_splits, bps, need_mask, last_block = _plan(rows, max_tile_rows, quantum)
    kernel = _make_kernel(contrib, len(inputs_2d), n_out,
                          tile_rows=tile_rows, rows=rows, bps=bps, need_mask=need_mask)

    def in_map(p, i):
        # Clamp so a phantom step (uneven split) never points past the array; its
        # contribution is zeroed by the in-kernel row mask.
        return (jnp.minimum(p * bps + i, last_block), 0)

    in_specs = [pl.BlockSpec((tile_rows, LANE), in_map) for _ in inputs_2d]
    out_specs = tuple(pl.BlockSpec((SUB, LANE), lambda p, i: (p, 0)) for _ in range(n_out))
    out_shape = tuple(jax.ShapeDtypeStruct((num_splits * SUB, LANE), jnp.float32)
                      for _ in range(n_out))

    cp_kwargs = dict(dimension_semantics=("parallel", "arbitrary"))
    if vmem_limit is not None:
        cp_kwargs["vmem_limit_bytes"] = int(vmem_limit)

    return pl.pallas_call(
        kernel,
        out_shape=out_shape,
        grid_spec=pltpu.PrefetchScalarGridSpec(
            num_scalar_prefetch=0,
            grid=(num_splits, bps),
            in_specs=in_specs,
            out_specs=out_specs,
        ),
        compiler_params=pltpu.CompilerParams(**cp_kwargs),
    )(*inputs_2d)


# --------------------------- BiReconstructionLoss --------------------------
def bi_reconstruction_loss(predict, target, *, sigma=SIGMA, gamma=GAMMA,
                           lambda_rec_back=LAMBDA_REC_BACK):
    gt_hat, outputs, _lr_hat = predict          # LR_hat unused in forward
    z = outputs[0]
    logdet = outputs[2]
    assert gt_hat.shape == target.shape

    gauss_const = 0.5 * float(np.log(2.0 * np.pi)) + float(np.log(sigma))
    n = int(z.shape[0])
    dim = int(z.shape[1]) * int(z.shape[2]) * int(z.shape[3])   # C * get_pixels(z)

    max_tile_rows, vmem_limit = _device_defaults()

    l1_sum = None
    sumsq = None

    fuse = int(gt_hat.size) == int(z.size)
    if fuse:
        quantum = _row_quantum(gt_hat, target, z)
        x2d, rows = _as_rows(gt_hat)
        if rows < quantum:
            fuse = False                         # too tiny for a kernel; plain JAX below
        else:
            t2d, _ = _as_rows(target)
            z2d, _ = _as_rows(z)
            l1_vec, sq_vec = _streaming_reduce(
                _fused_contrib, [x2d, t2d, z2d], 2,
                rows, quantum, max_tile_rows, vmem_limit)
            l1_sum = jnp.sum(l1_vec)
            sumsq = jnp.sum(sq_vec)

    if not fuse:
        quantum = _row_quantum(gt_hat, target)
        x2d, rows = _as_rows(gt_hat)
        if rows >= quantum:
            t2d, _ = _as_rows(target)
            (l1_vec,) = _streaming_reduce(
                _l1_contrib, [x2d, t2d], 1,
                rows, quantum, max_tile_rows, vmem_limit)
            l1_sum = jnp.sum(l1_vec)
        else:
            l1_sum = jnp.sum(jnp.abs(gt_hat.astype(jnp.float32) -
                                     target.astype(jnp.float32)))
        # Per perf review: a mismatched (typically smaller) z is a single-pass reduce
        # that XLA already does at roofline — no second pallas_call.
        zf = z.astype(jnp.float32)
        sumsq = jnp.sum(zf * zf)

    # Tiny final reductions + scalar math in plain JAX (negligible work).
    l1 = l1_sum / float(gt_hat.size)
    objective_mean = -sumsq / (2.0 * sigma * sigma * float(n) * float(dim)) - gauss_const
    logdet_mean = jnp.mean(logdet.astype(jnp.float32)) / float(dim)
    nll = -(objective_mean + logdet_mean)
    return lambda_rec_back * l1 + gamma * nll


# -------------------------------- reference --------------------------------
def _ref_loss(gt_hat, target, z, logdet):
    l1 = jnp.mean(jnp.abs(gt_hat - target))
    dim = float(z.shape[1] * z.shape[2] * z.shape[3])
    obj = jnp.sum(-z ** 2 / (2.0 * SIGMA ** 2) - GAUSS_CONST, axis=(1, 2, 3)) / dim
    obj = jnp.mean(obj)
    ld = jnp.mean(logdet / dim)
    nll = -(obj + ld)
    return LAMBDA_REC_BACK * l1 + GAMMA * nll


if __name__ == "__main__":
    key = jax.random.PRNGKey(0)
    loss_fn = jax.jit(bi_reconstruction_loss)

    def run_case(k, gt_shape, z_shape):
        k1, k2, k3, k4, k5 = jax.random.split(k, 5)
        gt_hat = jax.random.normal(k1, gt_shape, dtype=jnp.float32)
        target = jax.random.normal(k2, gt_shape, dtype=jnp.float32)
        z = jax.random.normal(k3, z_shape, dtype=jnp.float32)            # outputs[0]
        dummy = jnp.zeros(z_shape, jnp.float32)                          # outputs[1] (unused)
        logdet = jax.random.normal(k4, (z_shape[0],), jnp.float32) * 10.0  # outputs[2]
        lr_shape = (gt_shape[0], gt_shape[1],
                    max(1, gt_shape[2] // 2), max(1, gt_shape[3] // 2))
        lr_hat = jax.random.normal(k5, lr_shape, dtype=jnp.float32)      # unused in forward
        predict = (gt_hat, (z, dummy, logdet), lr_hat)
        loss = jax.block_until_ready(loss_fn(predict, target))
        ref = _ref_loss(gt_hat, target, z, logdet)
        assert jnp.allclose(loss, ref, rtol=2e-4, atol=1e-5), (
            gt_shape, z_shape, float(loss), float(ref))

    k1, k2, k3, k4 = jax.random.split(key, 4)

    # Main case (fused path): zero-copy reshape, single block.
    run_case(k1, (2, 4, 16, 16), (2, 4, 16, 16))
    # Lane-ragged case (numel % 128 != 0): exercises the padded fallback + row masking.
    run_case(k2, (2, 3, 15, 15), (2, 3, 15, 15))
    # Mismatched z size: L1 via the kernel, sum(z^2) via plain XLA reduce.
    run_case(k3, (2, 4, 16, 16), (2, 2, 16, 16))
    # Larger aligned case: 2-way TC split, ragged last tile masked, chunked fori_loop.
    run_case(k4, (2, 6, 90, 128), (2, 6, 90, 128))

    print("KERNEL_OK")
</pallas_src>

<mosaic_0001>
module attributes {stable_mosaic.version = 11 : i64} {
  func.func @kernel(%arg0: i32, %arg1: i32, %arg2: memref<16x128xf32, #tpu.memory_space<vmem>>, %arg3: memref<16x128xf32, #tpu.memory_space<vmem>>, %arg4: memref<16x128xf32, #tpu.memory_space<vmem>>, %arg5: memref<8x128xf32, #tpu.memory_space<vmem>>, %arg6: memref<8x128xf32, #tpu.memory_space<vmem>>) attributes {dimension_semantics = [#tpu.dimension_semantics<parallel>, #tpu.dimension_semantics<arbitrary>], iteration_bounds = array<i64: 1, 1>, scalar_prefetch = 0 : i64, scratch_operands = 0 : i64, tpu.core_type = #tpu.core_type<tc>, window_params = [{transform_indices = @transform_0, window_bounds = array<i64: 16, 128>}, {transform_indices = @transform_1, window_bounds = array<i64: 16, 128>}, {transform_indices = @transform_2, window_bounds = array<i64: 16, 128>}, {transform_indices = @transform_3, window_bounds = array<i64: 8, 128>}, {transform_indices = @transform_4, window_bounds = array<i64: 8, 128>}]} {
    %c0_i32 = arith.constant 0 : i32
    %0 = arith.cmpi eq, %arg1, %c0_i32 : i32
    %1 = arith.extui %0 : i1 to i32
    %c0_i32_0 = arith.constant 0 : i32
    %2 = arith.cmpi ne, %1, %c0_i32_0 : i32
    scf.if %2 {
      %cst_15 = arith.constant 0.000000e+00 : f32
      %28 = vector.broadcast %cst_15 : f32 to vector<8x128xf32>
      %c0_16 = arith.constant 0 : index
      %c0_17 = arith.constant 0 : index
      %29 = vector.load %arg5[%c0_16, %c0_17] : memref<8x128xf32, #tpu.memory_space<vmem>>, vector<8x128xf32>
      tpu.vector_store %arg5[%c0_16, %c0_17], %28 {strides = array<i32>} : memref<8x128xf32, #tpu.memory_space<vmem>>, vector<8x128xf32>,
      %cst_18 = arith.constant 0.000000e+00 : f32
      %30 = vector.broadcast %cst_18 : f32 to vector<8x128xf32>
      %c0_19 = arith.constant 0 : index
      %c0_20 = arith.constant 0 : index
      %31 = vector.load %arg6[%c0_19, %c0_20] : memref<8x128xf32, #tpu.memory_space<vmem>>, vector<8x128xf32>
      tpu.vector_store %arg6[%c0_19, %c0_20], %30 {strides = array<i32>} : memref<8x128xf32, #tpu.memory_space<vmem>>, vector<8x128xf32>,
    } else {
    }
    %cst = arith.constant 0.000000e+00 : f32
    %3 = vector.broadcast %cst : f32 to vector<8x128xf32>
    %cst_1 = arith.constant 0.000000e+00 : f32
    %4 = vector.broadcast %cst_1 : f32 to vector<8x128xf32>
    %c0_i32_2 = arith.constant 0 : i32
    %c16_i32 = arith.constant 16 : i32
    %5 = arith.muli %c0_i32_2, %c16_i32 : i32
    %6 = tpu.assume_multiple %5, 16 : i32
    %7 = arith.index_cast %6 : i32 to index
    %c0 = arith.constant 0 : index
    %8 = vector.load %arg2[%7, %c0] : memref<16x128xf32, #tpu.memory_space<vmem>>, vector<16x128xf32>
    %9 = arith.index_cast %6 : i32 to index
    %c0_3 = arith.constant 0 : index
    %10 = vector.load %arg3[%9, %c0_3] : memref<16x128xf32, #tpu.memory_space<vmem>>, vector<16x128xf32>
    %11 = arith.index_cast %6 : i32 to index
    %c0_4 = arith.constant 0 : index
    %12 = vector.load %arg4[%11, %c0_4] : memref<16x128xf32, #tpu.memory_space<vmem>>, vector<16x128xf32>
    %13 = arith.subf %8, %10 : vector<16x128xf32>
    %14 = math.absf %13 : vector<16x128xf32>
    %15 = arith.mulf %12, %12 : vector<16x128xf32>
    %16 = vector.shape_cast %14 : vector<16x128xf32> to vector<2x8x128xf32>
    %cst_5 = arith.constant dense<0.000000e+00> : vector<8x128xf32>
    %17 = vector.multi_reduction <add>, %16, %cst_5 [0] : vector<2x8x128xf32> to vector<8x128xf32>
    %18 = vector.shape_cast %15 : vector<16x128xf32> to vector<2x8x128xf32>
    %cst_6 = arith.constant dense<0.000000e+00> : vector<8x128xf32>
    %19 = vector.multi_reduction <add>, %18, %cst_6 [0] : vector<2x8x128xf32> to vector<8x128xf32>
    %20 = arith.addf %3, %17 : vector<8x128xf32>
    %21 = arith.addf %4, %19 : vector<8x128xf32>
    %c1_i32 = arith.constant 1 : i32
    %c0_7 = arith.constant 0 : index
    %c0_8 = arith.constant 0 : index
    %22 = vector.load %arg5[%c0_7, %c0_8] : memref<8x128xf32, #tpu.memory_space<vmem>>, vector<8x128xf32>
    %23 = arith.addf %22, %20 : vector<8x128xf32>
    %c0_9 = arith.constant 0 : index
    %c0_10 = arith.constant 0 : index
    %24 = vector.load %arg5[%c0_9, %c0_10] : memref<8x128xf32, #tpu.memory_space<vmem>>, vector<8x128xf32>
    tpu.vector_store %arg5[%c0_9, %c0_10], %23 {strides = array<i32>} : memref<8x128xf32, #tpu.memory_space<vmem>>, vector<8x128xf32>,
    %c0_11 = arith.constant 0 : index
    %c0_12 = arith.constant 0 : index
    %25 = vector.load %arg6[%c0_11, %c0_12] : memref<8x128xf32, #tpu.memory_space<vmem>>, vector<8x128xf32>
    %26 = arith.addf %25, %21 : vector<8x128xf32>
    %c0_13 = arith.constant 0 : index
    %c0_14 = arith.constant 0 : index
    %27 = vector.load %arg6[%c0_13, %c0_14] : memref<8x128xf32, #tpu.memory_space<vmem>>, vector<8x128xf32>
    tpu.vector_store %arg6[%c0_13, %c0_14], %26 {strides = array<i32>} : memref<8x128xf32, #tpu.memory_space<vmem>>, vector<8x128xf32>,
    return
  }
  func.func @transform_0(%arg0: i32, %arg1: i32) -> (i32, i32) {
    %c1_i32 = arith.constant 1 : i32
    %0 = arith.muli %arg0, %c1_i32 : i32
    %1 = arith.addi %0, %arg1 : i32
    %c0_i32 = arith.constant 0 : i32
    %2 = arith.minsi %1, %c0_i32 : i32
    %c0_i32_0 = arith.constant 0 : i32
    %c0_i32_1 = arith.constant 0 : i32
    return %2, %c0_i32_0 : i32, i32
  }
  func.func @transform_1(%arg0: i32, %arg1: i32) -> (i32, i32) {
    %c1_i32 = arith.constant 1 : i32
    %0 = arith.muli %arg0, %c1_i32 : i32
    %1 = arith.addi %0, %arg1 : i32
    %c0_i32 = arith.constant 0 : i32
    %2 = arith.minsi %1, %c0_i32 : i32
    %c0_i32_0 = arith.constant 0 : i32
    %c0_i32_1 = arith.constant 0 : i32
    return %2, %c0_i32_0 : i32, i32
  }
  func.func @transform_2(%arg0: i32, %arg1: i32) -> (i32, i32) {
    %c1_i32 = arith.constant 1 : i32
    %0 = arith.muli %arg0, %c1_i32 : i32
    %1 = arith.addi %0, %arg1 : i32
    %c0_i32 = arith.constant 0 : i32
    %2 = arith.minsi %1, %c0_i32 : i32
    %c0_i32_0 = arith.constant 0 : i32
    %c0_i32_1 = arith.constant 0 : i32
    return %2, %c0_i32_0 : i32, i32
  }
  func.func @transform_3(%arg0: i32, %arg1: i32) -> (i32, i32) {
    %c0_i32 = arith.constant 0 : i32
    %c0_i32_0 = arith.constant 0 : i32
    return %arg0, %c0_i32 : i32, i32
  }
  func.func @transform_4(%arg0: i32, %arg1: i32) -> (i32, i32) {
    %c0_i32 = arith.constant 0 : i32
    %c0_i32_0 = arith.constant 0 : i32
    return %arg0, %c0_i32 : i32, i32
  }
}

</mosaic_0001>

<llo_original>
// kernel: bi_reconstruction_loss.1
$region0: #{bi_reconstruction_loss.1}
  #allocation0 [shape = 'u32[]', space=smem, size = 0x4, offset = 0x4, fixed_abs, tag = 'smem constant byte address 0x4 - core index']
  #allocation1 [shape = 'u32[144,128]{1,0:T(1,128)}', space=vmem, size = 0x12000, scoped, tag = 'internal scratch']
  %s0 = inlined_call_operand.vmem [shape: f32[16,128], index: 0, kind: input, shape index: {}]
  %s1 = inlined_call_operand.vmem [shape: f32[16,128], index: 1, kind: input, shape index: {}]
  %s2 = inlined_call_operand.vmem [shape: f32[16,128], index: 2, kind: input, shape index: {}]
  %s3 = inlined_call_operand.vmem [shape: f32[8,128], index: 3, kind: output, shape index: {0}]
  %s4 = inlined_call_operand.vmem [shape: f32[8,128], index: 4, kind: output, shape index: {1}]
  %5 = xla_tuple %s3, %s4
  %s6 = sld [smem:[#allocation0]]
  $region34: #{bi_reconstruction_loss.1} parent=0
    _
  %s8 = ssub.s32 1, %s6
  %s9 = scalar_select 0, %s8, %s6
  // Predicated region
  $region2: #{bi_reconstruction_loss.1} parent=0 // pred_check
    _
  $region3: #{bi_reconstruction_loss.1} parent=0 // pred_check_branch
    %11 = sbr.rel (0) target = $region5
  $region4: #{bi_reconstruction_loss.1} parent=0 // pred_region
    %s12 = sadd.s32 0, 0
    %p13 = scmp.lt.s32.totalorder %s12, 0
    %s14 = scalar_select %p13, %s12, 0
    %s15 = smul.u32 2, %s14
    %p16 = scmp.lt.s32.totalorder %s15, 1
    %s17 = scalar_select %p16, %s15, 1
    %s18 = smul.addr %s17, 8
    %s19 = scalar_lea.vmem %s0, %s18
    %s20 = sadd.s32 0, 0
    %p21 = scmp.lt.s32.totalorder %s20, 0
    %s22 = scalar_select %p21, %s20, 0
    %s23 = smul.u32 2, %s22
  $region5: #{bi_reconstruction_loss.1} parent=0 // pred_fallthru
    _
  // Predicated region
  $region6: #{bi_reconstruction_loss.1} parent=0 // pred_check
    _
  $region7: #{bi_reconstruction_loss.1} parent=0 // pred_check_branch
    %25 = sbr.rel (0) target = $region9
  $region8: #{bi_reconstruction_loss.1} parent=0 // pred_region
    %s26 = sadd.s32 0, 0
    %p27 = scmp.lt.s32.totalorder %s26, 0
    %s28 = scalar_select %p27, %s26, 0
    %s29 = smul.u32 2, %s28
    %p30 = scmp.lt.s32.totalorder %s29, 1
    %s31 = scalar_select %p30, %s29, 1
    %s32 = smul.addr %s31, 8
    %s33 = scalar_lea.vmem %s1, %s32
    %s34 = sadd.s32 0, 0
    %p35 = scmp.lt.s32.totalorder %s34, 0
    %s36 = scalar_select %p35, %s34, 0
    %s37 = smul.u32 2, %s36
  $region9: #{bi_reconstruction_loss.1} parent=0 // pred_fallthru
    _
  // Predicated region
  $region10: #{bi_reconstruction_loss.1} parent=0 // pred_check
    _
  $region11: #{bi_reconstruction_loss.1} parent=0 // pred_check_branch
    %39 = sbr.rel (0) target = $region13
  $region12: #{bi_reconstruction_loss.1} parent=0 // pred_region
    %s40 = sadd.s32 0, 0
    %p41 = scmp.lt.s32.totalorder %s40, 0
    %s42 = scalar_select %p41, %s40, 0
    %s43 = smul.u32 2, %s42
    %p44 = scmp.lt.s32.totalorder %s43, 1
    %s45 = scalar_select %p44, %s43, 1
    %s46 = smul.addr %s45, 8
    %s47 = scalar_lea.vmem %s2, %s46
    %s48 = sadd.s32 0, 0
    %p49 = scmp.lt.s32.totalorder %s48, 0
    %s50 = scalar_select %p49, %s48, 0
    %s51 = smul.u32 2, %s50
  $region13: #{bi_reconstruction_loss.1} parent=0 // pred_fallthru
    _
  %s52 = sadd.s32 0, 0
  %p53 = scmp.lt.s32.totalorder %s52, 0
  %s54 = scalar_select %p53, %s52, 0
  %s55 = smul.u32 2, %s54
  %p56 = scmp.lt.s32.totalorder %s55, 1
  %s57 = scalar_select %p56, %s55, 1
  %s58 = smul.addr %s57, 8
  %s59 = scalar_lea.vmem %s0, %s58
  %s60 = sadd.s32 0, 0
  %p61 = scmp.lt.s32.totalorder %s60, 0
  %s62 = scalar_select %p61, %s60, 0
  %s63 = smul.u32 2, %s62
  %p64 = scmp.lt.s32.totalorder %s63, 1
  %s65 = scalar_select %p64, %s63, 1
  %s66 = smul.addr %s65, 8
  %s67 = scalar_lea.vmem %s1, %s66
  %s68 = sadd.s32 0, 0
  %p69 = scmp.lt.s32.totalorder %s68, 0
  %s70 = scalar_select %p69, %s68, 0
  %s71 = smul.u32 2, %s70
  %p72 = scmp.lt.s32.totalorder %s71, 1
  %s73 = scalar_select %p72, %s71, 1
  %s74 = smul.addr %s73, 8
  %s75 = scalar_lea.vmem %s2, %s74
  %s76 = sadd.s32 0, 0
  %p77 = scmp.lt.s32.totalorder %s76, 0
  %s78 = scalar_select %p77, %s76, 0
  %s79 = smul.u32 2, %s78
  %p80 = scmp.lt.s32.totalorder %s79, 1
  %s81 = scalar_select %p80, %s79, 1
  %s82 = smul.addr %s81, 8
  %s83 = scalar_lea.vmem %s0, %s82
  %s84 = sadd.s32 0, 0
  %p85 = scmp.lt.s32.totalorder %s84, 0
  %s86 = scalar_select %p85, %s84, 0
  %s87 = smul.u32 2, %s86
  %s88 = sadd.s32 0, 0
  %p89 = scmp.lt.s32.totalorder %s88, 0
  %s90 = scalar_select %p89, %s88, 0
  %s91 = smul.u32 2, %s90
  %p92 = scmp.lt.s32.totalorder %s91, 1
  %s93 = scalar_select %p92, %s91, 1
  %s94 = smul.addr %s93, 8
  %s95 = scalar_lea.vmem %s1, %s94
  %s96 = sadd.s32 0, 0
  %p97 = scmp.lt.s32.totalorder %s96, 0
  %s98 = scalar_select %p97, %s96, 0
  %s99 = smul.u32 2, %s98
  %s100 = sadd.s32 0, 0
  %p101 = scmp.lt.s32.totalorder %s100, 0
  %s102 = scalar_select %p101, %s100, 0
  %s103 = smul.u32 2, %s102
  %p104 = scmp.lt.s32.totalorder %s103, 1
  %s105 = scalar_select %p104, %s103, 1
  %s106 = smul.addr %s105, 8
  %s107 = scalar_lea.vmem %s2, %s106
  %s108 = sadd.s32 0, 0
  %p109 = scmp.lt.s32.totalorder %s108, 0
  %s110 = scalar_select %p109, %s108, 0
  %s111 = smul.u32 2, %s110
  %p112 = scmp.eq.s32.totalorder 0, 0
  // Predicated region
  $region14: #{bi_reconstruction_loss.1} parent=0 // pred_check
    %p113 = pneg %p112
  $region15: #{bi_reconstruction_loss.1} parent=0 // pred_check_branch
    %115 = sbr.rel (%p113) target = $region17
  $region16: #{bi_reconstruction_loss.1} parent=0 // pred_region
    %116 = vst [vmem:[%s3] sm:$0xff] 0.0
    %117 = vst [vmem:[%s4] sm:$0xff] 0.0
  $region17: #{bi_reconstruction_loss.1} parent=0 // pred_fallthru
    _
  %v118 = vld [vmem:[%s83] sm:$0xff]
  %v119 = vld [vmem:[%s83 + $0x8] sm:$0xff]
  %v120 = vld [vmem:[%s95] sm:$0xff]
  %v121 = vld [vmem:[%s95 + $0x8] sm:$0xff]
  %v122 = vld [vmem:[%s107] sm:$0xff]
  %v123 = vld [vmem:[%s107 + $0x8] sm:$0xff]
  %v124 = vsub.f32 %v118, %v120
  %v125 = vsub.f32 %v119, %v121
  %v126 = vand.u32 2147483647, %v124
  %v127 = vand.u32 2147483647, %v125
  %v128 = vmul.f32 %v122, %v122
  %v129 = vmul.f32 %v123, %v123
  %v130 = vadd.f32 %v126, %v127
  %v131 = vadd.f32 %v128, %v129
  %v132 = vadd.f32 %v130, 0.0
  %v133 = vadd.f32 %v131, 0.0
  %v134 = vld [vmem:[%s3] sm:$0xff]
  %v135 = vadd.f32 %v134, %v132
  %136 = vst [vmem:[%s3] sm:$0xff] %v135
  %v137 = vld [vmem:[%s4] sm:$0xff]
  %v138 = vadd.f32 %v137, %v133
  %139 = vst [vmem:[%s4] sm:$0xff] %v138
  // Predicated region
  $region18: #{bi_reconstruction_loss.1} parent=0 // pred_check
    _
  $region19: #{bi_reconstruction_loss.1} parent=0 // pred_check_branch
    %141 = sbr.rel (0) target = $region21
  $region20: #{bi_reconstruction_loss.1} parent=0 // pred_region
    _
  $region21: #{bi_reconstruction_loss.1} parent=0 // pred_fallthru
    _
  // Predicated region
  $region22: #{bi_reconstruction_loss.1} parent=0 // pred_check
    _
  $region23: #{bi_reconstruction_loss.1} parent=0 // pred_check_branch
    %143 = sbr.rel (0) target = $region25
  $region24: #{bi_reconstruction_loss.1} parent=0 // pred_region
    _
  $region25: #{bi_reconstruction_loss.1} parent=0 // pred_fallthru
    _
  // Predicated region
  $region26: #{bi_reconstruction_loss.1} parent=0 // pred_check
    _
  $region27: #{bi_reconstruction_loss.1} parent=0 // pred_check_branch
    %145 = sbr.rel (0) target = $region29
  $region28: #{bi_reconstruction_loss.1} parent=0 // pred_region
    _
  $region29: #{bi_reconstruction_loss.1} parent=0 // pred_fallthru
    _
  // Predicated region
  $region30: #{bi_reconstruction_loss.1} parent=0 // pred_check
    _
  $region31: #{bi_reconstruction_loss.1} parent=0 // pred_check_branch
    %147 = sbr.rel (0) target = $region33
  $region32: #{bi_reconstruction_loss.1} parent=0 // pred_region
    _
  $region33: #{bi_reconstruction_loss.1} parent=0 // pred_fallthru
    _

</llo_original>
